<compile_context>
chip_gen: v7x
topology: tpu7x:2x2x1
jax: 0.10.0
libtpu: 0.0.40
codegen_flags: <defaults>
</compile_context>

<pallas_src>
import functools

import jax
import jax.numpy as jnp
from jax.experimental import pallas as pl
from jax.experimental.pallas import tpu as pltpu


def _group_adapter_kernel(x_ref, w1_ref, b1_ref, w2_ref, b2_ref, o_ref):
    # x_ref:  (TN, C)   row tile (lane-dense over full channel dim)
    # w1_ref: (C, H)    block-diagonal fc_inter weights (in x out)
    # b1_ref: (1, H)
    # w2_ref: (H, C)    block-diagonal fc_outer weights (in x out)
    # b2_ref: (1, C)
    # o_ref:  (TN, C)
    x = x_ref[...]                                                   # single load, reused for residual
    h = jnp.dot(x, w1_ref[...], preferred_element_type=jnp.float32)
    h = jnp.maximum(h + b1_ref[...], 0.0)                            # bias + ReLU in f32
    h = h.astype(w2_ref.dtype)
    y = jnp.dot(h, w2_ref[...], preferred_element_type=jnp.float32)
    y = y + b2_ref[...] + x.astype(jnp.float32)                      # bias + residual
    o_ref[...] = y.astype(o_ref.dtype)                               # cast once at the store


def _block_diag(blocks):
    """(G, r, c) -> (G*r, G*c) block-diagonal matrix (tiny, built once)."""
    G, r, c = blocks.shape
    out = jnp.zeros((G * r, G * c), blocks.dtype)
    for g in range(G):
        out = out.at[g * r:(g + 1) * r, g * c:(g + 1) * c].set(blocks[g])
    return out


def _choose_row_tile(n_rows, n_cols, itemsize):
    """Largest row tile whose double-buffered in+out tiles fit ~12 MiB VMEM."""
    budget = 12 * 1024 * 1024
    max_rows = budget // (4 * n_cols * itemsize)      # 2 buffers x (in + out)
    tn = int(min(2048, max(8, max_rows)))
    tn = (tn // 8) * 8                                # sublane multiple of 8
    if n_rows <= tn:
        return n_rows                                 # full-dim block is always legal
    return tn


@functools.partial(jax.jit, static_argnames=("groups",))
def group_adapter(x, w1, b1, w2, b2, groups):
    """x: (..., C). w1: (G, Cg, Hg), b1: (G, Hg), w2: (G, Hg, Cg), b2: (G, Cg)."""
    orig_shape = x.shape
    C = orig_shape[-1]
    G = groups
    Hg = w1.shape[-1]
    H = G * Hg
    N = 1
    for d in orig_shape[:-1]:
        N *= d

    # (..., C) -> (N, C): leading-dim reshape only, no HBM transpose.
    x2 = x.reshape(N, C)

    # Fold the per-group linears into block-diagonal dense weights (exact:
    # off-diagonal blocks are zero, so group g only sees its own channels).
    w1_bd = _block_diag(w1)        # (C, H)
    w2_bd = _block_diag(w2)        # (H, C)
    b1_row = b1.reshape(1, H)
    b2_row = b2.reshape(1, C)

    tn = _choose_row_tile(N, C, x.dtype.itemsize)
    grid = (pl.cdiv(N, tn),)

    out2 = pl.pallas_call(
        _group_adapter_kernel,
        out_shape=jax.ShapeDtypeStruct((N, C), x.dtype),
        grid_spec=pltpu.PrefetchScalarGridSpec(
            num_scalar_prefetch=0,
            grid=grid,
            in_specs=[
                pl.BlockSpec((tn, C), lambda n: (n, 0)),
                pl.BlockSpec((C, H), lambda n: (0, 0)),   # constant block index:
                pl.BlockSpec((1, H), lambda n: (0, 0)),   #   weights/biases DMA'd once,
                pl.BlockSpec((H, C), lambda n: (0, 0)),   #   not re-fetched per row tile
                pl.BlockSpec((1, C), lambda n: (0, 0)),
            ],
            out_specs=pl.BlockSpec((tn, C), lambda n: (n, 0)),
        ),
        compiler_params=pltpu.CompilerParams(
            # Every row tile is independent (no accumulator across the grid),
            # so let v7x shard the grid across its two TensorCores.
            dimension_semantics=("parallel",)),
    )(x2, w1_bd, b1_row, w2_bd, b2_row)

    return out2.reshape(orig_shape)


def group_adapter_ref(x, w1, b1, w2, b2, groups):
    """Pure-JAX reference mirroring the PyTorch forward (per-group loop)."""
    C = x.shape[-1]
    Cg = C // groups
    out = jnp.zeros_like(x)
    for i in range(groups):
        xs = x[..., i * Cg:(i + 1) * Cg]
        m = jnp.maximum(xs @ w1[i] + b1[i], 0.0)
        m = m @ w2[i] + b2[i]
        out = out.at[..., i * Cg:(i + 1) * Cg].add(m)
    return out + x


if __name__ == "__main__":
    # Small shapes consistent with the module: x last dim = in_size.
    batch, seq = 2, 8
    in_size, hidden_size, groups = 32, 16, 4
    Cg = in_size // groups
    Hg = hidden_size // groups

    key = jax.random.PRNGKey(0)
    kx, kw1, kb1, kw2, kb2 = jax.random.split(key, 5)

    x = jax.random.normal(kx, (batch, seq, in_size), dtype=jnp.float32)
    # nn.Linear weight is (out, in); stored here pre-transposed as (in, out)
    # per group, matching the original kernel's parameter convention.
    w1 = jax.random.normal(kw1, (groups, Cg, Hg), dtype=jnp.float32) * 0.1
    b1 = jax.random.normal(kb1, (groups, Hg), dtype=jnp.float32) * 0.1
    w2 = jax.random.normal(kw2, (groups, Hg, Cg), dtype=jnp.float32) * 0.1
    b2 = jax.random.normal(kb2, (groups, Cg), dtype=jnp.float32) * 0.1

    out = group_adapter(x, w1, b1, w2, b2, groups)
    out = jax.block_until_ready(out)

    ref = group_adapter_ref(x, w1, b1, w2, b2, groups)
    assert jnp.allclose(out, ref, atol=1e-5, rtol=1e-5), "mismatch vs reference"

    print("KERNEL_OK")
</pallas_src>

<mosaic_0001>
module attributes {stable_mosaic.version = 11 : i64} {
  func.func @_group_adapter_kernel(%arg0: i32, %arg1: memref<16x32xf32, #tpu.memory_space<vmem>>, %arg2: memref<32x16xf32, #tpu.memory_space<vmem>>, %arg3: memref<1x16xf32, #tpu.memory_space<vmem>>, %arg4: memref<16x32xf32, #tpu.memory_space<vmem>>, %arg5: memref<1x32xf32, #tpu.memory_space<vmem>>, %arg6: memref<16x32xf32, #tpu.memory_space<vmem>>) attributes {dimension_semantics = [#tpu.dimension_semantics<parallel>], iteration_bounds = array<i64: 1>, scalar_prefetch = 0 : i64, scratch_operands = 0 : i64, tpu.core_type = #tpu.core_type<tc>, window_params = [{transform_indices = @transform_0, window_bounds = array<i64: 16, 32>}, {pipeline_mode = #tpu.pipeline_mode<synchronous>, transform_indices = @transform_1, window_bounds = array<i64: 32, 16>}, {pipeline_mode = #tpu.pipeline_mode<synchronous>, transform_indices = @transform_2, window_bounds = array<i64: 1, 16>}, {pipeline_mode = #tpu.pipeline_mode<synchronous>, transform_indices = @transform_3, window_bounds = array<i64: 16, 32>}, {pipeline_mode = #tpu.pipeline_mode<synchronous>, transform_indices = @transform_4, window_bounds = array<i64: 1, 32>}, {transform_indices = @transform_5, window_bounds = array<i64: 16, 32>}]} {
    %c0 = arith.constant 0 : index
    %c0_0 = arith.constant 0 : index
    %0 = vector.load %arg1[%c0, %c0_0] : memref<16x32xf32, #tpu.memory_space<vmem>>, vector<16x32xf32>
    %c0_1 = arith.constant 0 : index
    %c0_2 = arith.constant 0 : index
    %1 = vector.load %arg2[%c0_1, %c0_2] : memref<32x16xf32, #tpu.memory_space<vmem>>, vector<32x16xf32>
    %cst = arith.constant dense<0.000000e+00> : vector<16x16xf32>
    %2 = tpu.matmul %0, %1, %cst {dimension_numbers = #tpu.dot_dimension_numbers<[1], [0], [0], [1], [0, 0, 1, 1], [], []>} : vector<16x32xf32>, vector<32x16xf32>, vector<16x16xf32> -> vector<16x16xf32>
    %c0_3 = arith.constant 0 : index
    %c0_4 = arith.constant 0 : index
    %3 = vector.load %arg3[%c0_3, %c0_4] : memref<1x16xf32, #tpu.memory_space<vmem>>, vector<1x16xf32>
    %4 = vector.broadcast %3 : vector<1x16xf32> to vector<16x16xf32>
    %5 = arith.addf %2, %4 : vector<16x16xf32>
    %cst_5 = arith.constant 0.000000e+00 : f32
    %6 = vector.broadcast %cst_5 : f32 to vector<16x16xf32>
    %7 = arith.maximumf %5, %6 : vector<16x16xf32>
    %c0_6 = arith.constant 0 : index
    %c0_7 = arith.constant 0 : index
    %8 = vector.load %arg4[%c0_6, %c0_7] : memref<16x32xf32, #tpu.memory_space<vmem>>, vector<16x32xf32>
    %cst_8 = arith.constant dense<0.000000e+00> : vector<16x32xf32>
    %9 = tpu.matmul %7, %8, %cst_8 {dimension_numbers = #tpu.dot_dimension_numbers<[1], [0], [0], [1], [0, 0, 1, 1], [], []>} : vector<16x16xf32>, vector<16x32xf32>, vector<16x32xf32> -> vector<16x32xf32>
    %c0_9 = arith.constant 0 : index
    %c0_10 = arith.constant 0 : index
    %10 = vector.load %arg5[%c0_9, %c0_10] : memref<1x32xf32, #tpu.memory_space<vmem>>, vector<1x32xf32>
    %11 = vector.broadcast %10 : vector<1x32xf32> to vector<16x32xf32>
    %12 = arith.addf %9, %11 : vector<16x32xf32>
    %13 = arith.addf %12, %0 : vector<16x32xf32>
    %c0_11 = arith.constant 0 : index
    %c0_12 = arith.constant 0 : index
    %14 = vector.load %arg6[%c0_11, %c0_12] : memref<16x32xf32, #tpu.memory_space<vmem>>, vector<16x32xf32>
    tpu.vector_store %arg6[%c0_11, %c0_12], %13 {strides = array<i32>} : memref<16x32xf32, #tpu.memory_space<vmem>>, vector<16x32xf32>,
    return
  }
  func.func @transform_0(%arg0: i32) -> (i32, i32) {
    %c0_i32 = arith.constant 0 : i32
    %c0_i32_0 = arith.constant 0 : i32
    return %arg0, %c0_i32 : i32, i32
  }
  func.func @transform_1(%arg0: i32) -> (i32, i32) {
    %c0_i32 = arith.constant 0 : i32
    %c0_i32_0 = arith.constant 0 : i32
    %c0_i32_1 = arith.constant 0 : i32
    return %c0_i32, %c0_i32_0 : i32, i32
  }
  func.func @transform_2(%arg0: i32) -> (i32, i32) {
    %c0_i32 = arith.constant 0 : i32
    %c0_i32_0 = arith.constant 0 : i32
    %c0_i32_1 = arith.constant 0 : i32
    return %c0_i32, %c0_i32_0 : i32, i32
  }
  func.func @transform_3(%arg0: i32) -> (i32, i32) {
    %c0_i32 = arith.constant 0 : i32
    %c0_i32_0 = arith.constant 0 : i32
    %c0_i32_1 = arith.constant 0 : i32
    return %c0_i32, %c0_i32_0 : i32, i32
  }
  func.func @transform_4(%arg0: i32) -> (i32, i32) {
    %c0_i32 = arith.constant 0 : i32
    %c0_i32_0 = arith.constant 0 : i32
    %c0_i32_1 = arith.constant 0 : i32
    return %c0_i32, %c0_i32_0 : i32, i32
  }
  func.func @transform_5(%arg0: i32) -> (i32, i32) {
    %c0_i32 = arith.constant 0 : i32
    %c0_i32_0 = arith.constant 0 : i32
    return %arg0, %c0_i32 : i32, i32
  }
}

</mosaic_0001>

<llo_original>
// kernel: group_adapter.1
$region0: #{group_adapter.1}
  #allocation0 [shape = 'u32[]', space=smem, size = 0x4, offset = 0x4, fixed_abs, tag = 'smem constant byte address 0x4 - core index']
  #allocation1 [shape = 'u32[144,128]{1,0:T(1,128)}', space=vmem, size = 0x12000, scoped, tag = 'internal scratch']
  %s0 = inlined_call_operand.vmem [shape: f32[16,32], index: 0, kind: input, shape index: {}]
  %s1 = inlined_call_operand.vmem [shape: f32[32,16], index: 1, kind: input, shape index: {}]
  %s2 = inlined_call_operand.vmem [shape: f32[1,16], index: 2, kind: input, shape index: {}]
  %s3 = inlined_call_operand.vmem [shape: f32[16,32], index: 3, kind: input, shape index: {}]
  %s4 = inlined_call_operand.vmem [shape: f32[1,32], index: 4, kind: input, shape index: {}]
  %s5 = inlined_call_operand.hbm [shape: f32[16,32], index: 5, kind: output, shape index: {}]
  %s6 = sld [smem:[#allocation0]]
  $region30: #{group_adapter.1} parent=0
    _
  %s8 = ssub.s32 1, %s6
  %s9 = scalar_select 0, %s8, %s6
  $region1: #{group_adapter.1} parent=0
    #allocation2 [shape = 'u8[8192]{0}', space=vmem, size = 0x2000, scoped, tag = 'output window, operand 0, single buffered']
    #allocation3 [shape = 's32[1]{0}', space=sflag, size = 0x4, scoped, tag = 'scoped memory for group_adapter.1']
    %10 = vsyncpa [#allocation3], 0
    // Predicated region
    $region2: #{group_adapter.1} parent=1 // pred_check
      _
    $region3: #{group_adapter.1} parent=1 // pred_check_branch
      %12 = sbr.rel (0) target = $region5
    $region4: #{group_adapter.1} parent=1 // pred_region
      _
    $region5: #{group_adapter.1} parent=1 // pred_fallthru
      _
    // Predicated region
    $region6: #{group_adapter.1} parent=1 // pred_check
      _
    $region7: #{group_adapter.1} parent=1 // pred_check_branch
      %14 = sbr.rel (0) target = $region9
    $region8: #{group_adapter.1} parent=1 // pred_region
      _
    $region9: #{group_adapter.1} parent=1 // pred_fallthru
      _
    // Predicated region
    $region10: #{group_adapter.1} parent=1 // pred_check
      _
    $region11: #{group_adapter.1} parent=1 // pred_check_branch
      %16 = sbr.rel (0) target = $region13
    $region12: #{group_adapter.1} parent=1 // pred_region
      _
    $region13: #{group_adapter.1} parent=1 // pred_fallthru
      _
    // Predicated region
    $region14: #{group_adapter.1} parent=1 // pred_check
      _
    $region15: #{group_adapter.1} parent=1 // pred_check_branch
      %18 = sbr.rel (0) target = $region17
    $region16: #{group_adapter.1} parent=1 // pred_region
      _
    $region17: #{group_adapter.1} parent=1 // pred_fallthru
      _
    // Predicated region
    $region18: #{group_adapter.1} parent=1 // pred_check
      _
    $region19: #{group_adapter.1} parent=1 // pred_check_branch
      %20 = sbr.rel (0) target = $region21
    $region20: #{group_adapter.1} parent=1 // pred_region
      _
    $region21: #{group_adapter.1} parent=1 // pred_fallthru
      _
    %v21 = vld [vmem:[%s0] sm:$0xff]
    %v22 = vld [vmem:[%s0 + $0x8] sm:$0xff]
    %v23 = vld [vmem:[%s1] sm:$0xff]
    %v24 = vld [vmem:[%s1 + $0x8] sm:$0xff]
    %v25 = vld [vmem:[%s1 + $0x10] sm:$0xff]
    %v26 = vld [vmem:[%s1 + $0x18] sm:$0xff]
    %v27 = vld [vmem:[%s2] sm:$0x1]
    %v29 = vlaneseq
    %v30 = vshrl.u32 %v29, 7
    %v31 = vsub.s32 0, %v30
    %v32 = vrot.slane %v27, %v31
    %vm34 = vcmask 261120
    %v36 = vsel %vm34, %v21, 0
    %v39 = vsel %vm34, %v22, 0
    %41 = vmatprep.subr.mxu0 0.0
    %42 = vmatpush1.msra.mxu0 %v23
    %43 = vmatprep.subr.mxu0 0.0
    %44 = vmatpush1.msra.mxu0 %v24
    %45 = vmatprep.subr.mxu0 0.0
    %46 = vmatpush1.msra.mxu0 %v25
    %47 = vmatprep.subr.mxu0 0.0
    %48 = vmatpush1.msra.mxu0 %v26
    %49 = vmatprep.subr.mxu0 0.0
    %50 = vmatpush1.msra.mxu0 0.0
    %51 = vmatprep.subr.mxu0 0.0
    %52 = vmatpush1.msra.mxu0 0.0
    %53 = vmatprep.subr.mxu0 0.0
    %54 = vmatpush1.msra.mxu0 0.0
    %55 = vmatprep.subr.mxu0 0.0
    %56 = vmatpush1.msra.mxu0 0.0
    %57 = vmatprep.subr.mxu0 0.0
    %58 = vmatpush1.msra.mxu0 0.0
    %59 = vmatprep.subr.mxu0 0.0
    %60 = vmatpush1.msra.mxu0 0.0
    %61 = vmatprep.subr.mxu0 0.0
    %62 = vmatpush1.msra.mxu0 0.0
    %63 = vmatprep.subr.mxu0 0.0
    %64 = vmatpush1.msra.mxu0 0.0
    %65 = vmatprep.subr.mxu0 0.0
    %66 = vmatpush1.msra.mxu0 0.0
    %67 = vmatprep.subr.mxu0 0.0
    %68 = vmatpush1.msra.mxu0 0.0
    %69 = vmatprep.subr.mxu0 0.0
    %70 = vmatpush1.msra.mxu0 0.0
    %71 = vmatprep.subr.mxu0 0.0
    %72 = vmatpush1.msra.mxu0 0.0
    %73 = vmatprep.subr.mxu0 0.0
    %74 = vmatpush1.msra.mxu0 0.0
    %75 = vmatprep.subr.mxu0 0.0
    %76 = vmatpush1.msra.mxu0 0.0
    %77 = vmatprep.subr.mxu0 0.0
    %78 = vmatpush1.msra.mxu0 0.0
    %79 = vmatprep.subr.mxu0 0.0
    %80 = vmatpush1.msra.mxu0 0.0
    %81 = vmatprep.subr.mxu0 0.0
    %82 = vmatpush1.msra.mxu0 0.0
    %83 = vmatprep.subr.mxu0 0.0
    %84 = vmatpush1.msra.mxu0 0.0
    %85 = vmatprep.subr.mxu0 0.0
    %86 = vmatpush1.msra.mxu0 0.0
    %87 = vmatprep.subr.mxu0 0.0
    %88 = vmatpush1.msra.mxu0 0.0
    %89 = vmatprep.subr.mxu0 0.0
    %90 = vmatpush1.msra.mxu0 0.0
    %91 = vmatprep.subr.mxu0 0.0
    %92 = vmatpush1.msra.mxu0 0.0
    %93 = vmatprep.subr.mxu0 0.0
    %94 = vmatpush1.msra.mxu0 0.0
    %95 = vmatprep.subr.mxu0 0.0
    %96 = vmatpush1.msra.mxu0 0.0
    %97 = vmatprep.subr.mxu0 0.0
    %98 = vmatpush1.msra.mxu0 0.0
    %99 = vmatprep.subr.mxu0 0.0
    %100 = vmatpush1.msra.mxu0 0.0
    %101 = vmatprep.subr.mxu0 0.0
    %102 = vmatpush1.msra.mxu0 0.0
    %103 = vmatprep.subr.mxu0 0.0
    %104 = vmatpush1.msra.mxu0 0.0
    %105 = vmatprep.mubr.f32.mxu0 0.0
    %106 = vmatmul.mubr.f32.gmra.mrb[0].mxu0 %v36
    %v107 = vpop.f32.mrb[0].mxu0
    %v108 = vadd.f32 %v32, %v107
    %v109 = vpop.f32.mrb[0].mxu0
    %110 = vmatprep.mubr.f32.mxu0 0.0
    %111 = vmatmul.mubr.f32.gmra.mrb[0].mxu0 %v39
    %v112 = vpop.f32.mrb[0].mxu0
    %v113 = vadd.f32 %v32, %v112
    %v114 = vpop.f32.mrb[0].mxu0
    %115 = vdwg.mxu0
    %v116 = vmax.f32 %v108, 0.0
    %v117 = vmax.f32 %v113, 0.0
    %v118 = vld [vmem:[%s3] sm:$0xff]
    %v119 = vld [vmem:[%s3 + $0x8] sm:$0xff]
    %v120 = vld [vmem:[%s4] sm:$0x1]
    %v122 = vlaneseq
    %v123 = vshrl.u32 %v122, 7
    %v124 = vsub.s32 0, %v123
    %v125 = vrot.slane %v120, %v124
    %vm127 = vcmask 130048
    %v129 = vsel %vm127, %v116, 0
    %v132 = vsel %vm127, %v117, 0
    %134 = vmatprep.subr.mxu0 0.0
    %135 = vmatpush1.msra.mxu0 %v118
    %136 = vmatprep.subr.mxu0 0.0
    %137 = vmatpush1.msra.mxu0 %v119
    %138 = vmatprep.subr.mxu0 0.0
    %139 = vmatpush1.msra.mxu0 0.0
    %140 = vmatprep.subr.mxu0 0.0
    %141 = vmatpush1.msra.mxu0 0.0
    %142 = vmatprep.subr.mxu0 0.0
    %143 = vmatpush1.msra.mxu0 0.0
    %144 = vmatprep.subr.mxu0 0.0
    %145 = vmatpush1.msra.mxu0 0.0
    %146 = vmatprep.subr.mxu0 0.0
    %147 = vmatpush1.msra.mxu0 0.0
    %148 = vmatprep.subr.mxu0 0.0
    %149 = vmatpush1.msra.mxu0 0.0
    %150 = vmatprep.subr.mxu0 0.0
    %151 = vmatpush1.msra.mxu0 0.0
    %152 = vmatprep.subr.mxu0 0.0
    %153 = vmatpush1.msra.mxu0 0.0
    %154 = vmatprep.subr.mxu0 0.0
    %155 = vmatpush1.msra.mxu0 0.0
    %156 = vmatprep.subr.mxu0 0.0
    %157 = vmatpush1.msra.mxu0 0.0
    %158 = vmatprep.subr.mxu0 0.0
    %159 = vmatpush1.msra.mxu0 0.0
    %160 = vmatprep.subr.mxu0 0.0
    %161 = vmatpush1.msra.mxu0 0.0
    %162 = vmatprep.subr.mxu0 0.0
    %163 = vmatpush1.msra.mxu0 0.0
    %164 = vmatprep.subr.mxu0 0.0
    %165 = vmatpush1.msra.mxu0 0.0
    %166 = vmatprep.subr.mxu0 0.0
    %167 = vmatpush1.msra.mxu0 0.0
    %168 = vmatprep.subr.mxu0 0.0
    %169 = vmatpush1.msra.mxu0 0.0
    %170 = vmatprep.subr.mxu0 0.0
    %171 = vmatpush1.msra.mxu0 0.0
    %172 = vmatprep.subr.mxu0 0.0
    %173 = vmatpush1.msra.mxu0 0.0
    %174 = vmatprep.subr.mxu0 0.0
    %175 = vmatpush1.msra.mxu0 0.0
    %176 = vmatprep.subr.mxu0 0.0
    %177 = vmatpush1.msra.mxu0 0.0
    %178 = vmatprep.subr.mxu0 0.0
    %179 = vmatpush1.msra.mxu0 0.0
    %180 = vmatprep.subr.mxu0 0.0
    %181 = vmatpush1.msra.mxu0 0.0
    %182 = vmatprep.subr.mxu0 0.0
    %183 = vmatpush1.msra.mxu0 0.0
    %184 = vmatprep.subr.mxu0 0.0
    %185 = vmatpush1.msra.mxu0 0.0
    %186 = vmatprep.subr.mxu0 0.0
    %187 = vmatpush1.msra.mxu0 0.0
    %188 = vmatprep.subr.mxu0 0.0
    %189 = vmatpush1.msra.mxu0 0.0
    %190 = vmatprep.subr.mxu0 0.0
    %191 = vmatpush1.msra.mxu0 0.0
    %192 = vmatprep.subr.mxu0 0.0
    %193 = vmatpush1.msra.mxu0 0.0
    %194 = vmatprep.subr.mxu0 0.0
    %195 = vmatpush1.msra.mxu0 0.0
    %196 = vmatprep.subr.mxu0 0.0
    %197 = vmatpush1.msra.mxu0 0.0
    %198 = vmatprep.mubr.f32.mxu0 0.0
    %199 = vmatmul.mubr.f32.gmra.mrb[0].mxu0 %v129
    %v200 = vpop.f32.mrb[0].mxu0
    %v201 = vadd.f32 %v125, %v200
    %v202 = vpop.f32.mrb[0].mxu0
    %203 = vmatprep.mubr.f32.mxu0 0.0
    %204 = vmatmul.mubr.f32.gmra.mrb[0].mxu0 %v132
    %v205 = vpop.f32.mrb[0].mxu0
    %v206 = vadd.f32 %v125, %v205
    %v207 = vpop.f32.mrb[0].mxu0
    %208 = vdwg.mxu0
    %v209 = vadd.f32 %v201, %v21
    %v210 = vadd.f32 %v206, %v22
    %211 = vst.msk [vmem:[#allocation2] sm:$0xff] %vm34, %v209
    %212 = vst.msk [vmem:[#allocation2 + $0x8] sm:$0xff] %vm34, %v210
    // Predicated region
    $region22: #{group_adapter.1} parent=1 // pred_check
      _
    $region23: #{group_adapter.1} parent=1 // pred_check_branch
      %214 = sbr.rel (0) target = $region25
    $region24: #{group_adapter.1} parent=1 // pred_region
      %s216 = ssub.s32 256, 256
      %217 = vsyncadd [#allocation3], %s216
      %s218 = sshll.u32 [#allocation2], 4
      %s219 = int_to_ptr.vmem [resolvable:$true] %s218
      %224 = dma.vmem_to_hbm [thread:$0]  %s219, 256, %s5, [#allocation3], 128, 128, 8
    $region25: #{group_adapter.1} parent=1 // pred_fallthru
      _
    // Predicated region
    $region26: #{group_adapter.1} parent=1 // pred_check
      _
    $region27: #{group_adapter.1} parent=1 // pred_check_branch
      %226 = sbr.rel (0) target = $region29
    $region28: #{group_adapter.1} parent=1 // pred_region
      %227 = dma.done [#allocation3], 256
    $region29: #{group_adapter.1} parent=1 // pred_fallthru
      _
    %228 = vsyncpa [#allocation3], 1

</llo_original>
